<compile_context>
chip_gen: v7x
topology: tpu7x:2x2x1
jax: 0.10.0
libtpu: 0.0.40
codegen_flags: <defaults>
</compile_context>

<pallas_src>
import functools

import jax
import jax.numpy as jnp
from jax.experimental import pallas as pl
from jax.experimental.pallas import tpu as pltpu

LANE = 128          # lane width (last-dim alignment)
BF16_SUBLANE = 16   # sublane packing height for bf16 tiles


def _round_up(n, m):
    return ((n + m - 1) // m) * m


def _cdiv(a, b):
    return (a + b - 1) // b


def _pad2d(a, rows, cols):
    return jnp.pad(a, ((0, rows - a.shape[0]), (0, cols - a.shape[1])))


@functools.lru_cache(maxsize=1)
def _num_tensorcores_per_chip():
    """2 for v7x-class chips (megacore grid sharding), else 1."""
    try:
        kind = jax.devices()[0].device_kind.lower()
        if ("v7" in kind) or ("7x" in kind) or ("tpu7" in kind):
            return 2
    except Exception:
        pass
    return 1


def _pick_batch_tile(B, n_cores):
    # >= n_cores grid steps so both v7x TensorCores get work; otherwise keep tiles
    # big (up to 256) so single-TC chips pay as few ~0.35us grid-step overheads
    # as possible.  Tiles rounded to 16 for bf16 sublane packing.
    if B <= BF16_SUBLANE:
        return _round_up(max(B, 1), BF16_SUBLANE)
    tb = _round_up(_cdiv(B, max(n_cores, 1)), BF16_SUBLANE)
    return min(tb, 256)


def ffn_kernel(x_ref, w1_ref, b1_ref, w2_ref, b2_ref, w3_ref, b3_ref, o_ref):
    # fc1 + ReLU  (bf16 operands, f32 accumulation on the MXU; elementwise in f32)
    h = jnp.dot(x_ref[...], w1_ref[...], preferred_element_type=jnp.float32)
    h = jnp.maximum(h + b1_ref[...], 0.0).astype(jnp.bfloat16)
    # fc2 + ReLU
    h = jnp.dot(h, w2_ref[...], preferred_element_type=jnp.float32)
    h = jnp.maximum(h + b2_ref[...], 0.0).astype(jnp.bfloat16)
    # fc3
    y = jnp.dot(h, w3_ref[...], preferred_element_type=jnp.float32) + b3_ref[...]
    o_ref[...] = y.astype(o_ref.dtype)


def init_params(key, input_dim=100, hidden_dim=100, output_dim=10, dtype=jnp.float32):
    """Deterministic init mimicking nn.Linear's U(-1/sqrt(fan_in), 1/sqrt(fan_in))."""
    keys = jax.random.split(key, 6)

    def linear(kw, kb, fan_in, fan_out):
        bound = 1.0 / jnp.sqrt(fan_in)
        # stored (in, out) so the kernel does x @ W + b  (== x @ W_pt.T + b)
        w = jax.random.uniform(kw, (fan_in, fan_out), dtype, minval=-bound, maxval=bound)
        b = jax.random.uniform(kb, (1, fan_out), dtype, minval=-bound, maxval=bound)
        return w, b

    w1, b1 = linear(keys[0], keys[1], input_dim, hidden_dim)
    w2, b2 = linear(keys[2], keys[3], hidden_dim, hidden_dim)
    w3, b3 = linear(keys[4], keys[5], hidden_dim, output_dim)
    return (w1, b1, w2, b2, w3, b3)


def prepare_params(params):
    """One-time pad (lane-dense, multiples of 128) + cast (bf16 weights / f32 biases).

    Padded rows/cols and padded bias entries are zero, so padded feature columns stay
    exactly 0 through both ReLUs.  Returns (padded_params, output_dim).
    """
    w1, b1, w2, b2, w3, b3 = params
    D, H = w1.shape
    O = w3.shape[1]
    Dp, Hp, Op = _round_up(D, LANE), _round_up(H, LANE), _round_up(O, LANE)

    w1_p = _pad2d(w1, Dp, Hp).astype(jnp.bfloat16)
    w2_p = _pad2d(w2, Hp, Hp).astype(jnp.bfloat16)
    w3_p = _pad2d(w3, Hp, Op).astype(jnp.bfloat16)
    b1_p = _pad2d(b1, 1, Hp).astype(jnp.float32)
    b2_p = _pad2d(b2, 1, Hp).astype(jnp.float32)
    b3_p = _pad2d(b3, 1, Op).astype(jnp.float32)
    padded = (w1_p, b1_p, w2_p, b2_p, w3_p, b3_p)
    padded = jax.tree_util.tree_map(jax.block_until_ready, padded)
    return padded, O


def _feedforward_net_impl(x, padded_params, output_dim):
    w1, b1, w2, b2, w3, b3 = padded_params
    B, D = x.shape
    Dp, Hp = w1.shape
    Op = w3.shape[1]
    assert D <= Dp, "input feature dim exceeds padded weight dim"

    n_cores = _num_tensorcores_per_chip()
    TB = _pick_batch_tile(B, n_cores)
    Bp = _round_up(B, TB)
    grid = (Bp // TB,)

    # Only the activation needs per-call padding / casting.
    x_p = _pad2d(x, Bp, Dp).astype(jnp.bfloat16)

    # VMEM budget: single-buffered resident weights/biases + double-buffered x/out
    # tiles + headroom for f32 intermediates.  Small here; clamp to v7x's 64 MiB.
    resident_bytes = 2 * (Dp * Hp + Hp * Hp + Hp * Op) + 4 * (2 * Hp + Op)
    streamed_bytes = 2 * (TB * Dp * 2) + 2 * (TB * Op * 2)
    scratch_bytes = 2 * TB * Hp * 4
    vmem_limit = min(max(2 * (resident_bytes + streamed_bytes + scratch_bytes),
                         16 << 20), 64 << 20)
    # TODO(synk): for very large hidden dims (resident bf16 weights >~24 MiB) switch
    # to a K-tiled reduction grid axis with an f32 accumulator instead of fully
    # resident weights, so the plan still fits v7x's 64 MiB VMEM.

    flops = 2 * Bp * (Dp * Hp + Hp * Hp + Hp * Op)
    bytes_accessed = (
        x_p.size * 2
        + (w1.size + w2.size + w3.size) * 2
        + (b1.size + b2.size + b3.size) * 4
        + Bp * Op * 2
    )

    resident = dict(pipeline_mode=pl.Buffered(1))  # constant blocks: no double buffer

    out_p = pl.pallas_call(
        ffn_kernel,
        out_shape=jax.ShapeDtypeStruct((Bp, Op), jnp.bfloat16),
        grid_spec=pltpu.PrefetchScalarGridSpec(
            num_scalar_prefetch=0,
            grid=grid,
            in_specs=[
                pl.BlockSpec((TB, Dp), lambda i: (i, 0)),               # x tile (streamed)
                pl.BlockSpec((Dp, Hp), lambda i: (0, 0), **resident),   # w1 (resident)
                pl.BlockSpec((1, Hp), lambda i: (0, 0), **resident),    # b1
                pl.BlockSpec((Hp, Hp), lambda i: (0, 0), **resident),   # w2 (resident)
                pl.BlockSpec((1, Hp), lambda i: (0, 0), **resident),    # b2
                pl.BlockSpec((Hp, Op), lambda i: (0, 0), **resident),   # w3 (resident)
                pl.BlockSpec((1, Op), lambda i: (0, 0), **resident),    # b3
            ],
            out_specs=pl.BlockSpec((TB, Op), lambda i: (i, 0)),
        ),
        compiler_params=pltpu.CompilerParams(
            dimension_semantics=("parallel",),      # megacore sharding on v7x
            vmem_limit_bytes=int(vmem_limit),
        ),
        cost_estimate=pl.CostEstimate(
            flops=flops, transcendentals=0, bytes_accessed=bytes_accessed
        ),
    )(x_p, w1, b1, w2, b2, w3, b3)

    # Slice padded batch rows / output columns off and restore the module's f32 dtype.
    return out_p[:B, :output_dim].astype(jnp.float32)


feedforward_net = jax.jit(_feedforward_net_impl, static_argnums=(2,))


def reference(x, params):
    w1, b1, w2, b2, w3, b3 = params
    h = jnp.maximum(x @ w1 + b1, 0.0)
    h = jnp.maximum(h @ w2 + b2, 0.0)
    return h @ w3 + b3


if __name__ == "__main__":
    key = jax.random.PRNGKey(0)
    kx, kp = jax.random.split(key)

    # Module defaults: 100 -> 100 -> 100 -> 10.  B=100 exercises both batch and
    # feature padding paths (and a 2-step grid on v7x).
    B, input_dim, hidden_dim, output_dim = 100, 100, 100, 10
    x = jax.random.normal(kx, (B, input_dim), dtype=jnp.float32)
    params = init_params(kp, input_dim, hidden_dim, output_dim)

    # One-time pad + cast of the weights (outside the per-call hot path).
    padded_params, out_dim = prepare_params(params)

    out = feedforward_net(x, padded_params, out_dim)
    out = jax.block_until_ready(out)

    ref = reference(x, params)
    assert out.shape == (B, output_dim), out.shape
    # bf16 matmul inputs / bf16 kernel output with f32 accumulation -> small error vs f32 ref
    err = float(jnp.max(jnp.abs(out - ref)))
    assert jnp.allclose(out, ref, atol=5e-2, rtol=5e-2), f"max abs err {err}"

    print("KERNEL_OK")
</pallas_src>

<mosaic_0001>
module attributes {stable_mosaic.version = 11 : i64} {
  func.func @ffn_kernel(%arg0: i32, %arg1: memref<112x128xbf16, #tpu.memory_space<vmem>>, %arg2: memref<128x128xbf16, #tpu.memory_space<vmem>>, %arg3: memref<1x128xf32, #tpu.memory_space<vmem>>, %arg4: memref<128x128xbf16, #tpu.memory_space<vmem>>, %arg5: memref<1x128xf32, #tpu.memory_space<vmem>>, %arg6: memref<128x128xbf16, #tpu.memory_space<vmem>>, %arg7: memref<1x128xf32, #tpu.memory_space<vmem>>, %arg8: memref<112x128xbf16, #tpu.memory_space<vmem>>) attributes {dimension_semantics = [#tpu.dimension_semantics<parallel>], iteration_bounds = array<i64: 1>, scalar_prefetch = 0 : i64, scratch_operands = 0 : i64, tpu.core_type = #tpu.core_type<tc>, window_params = [{transform_indices = @transform_0, window_bounds = array<i64: 112, 128>}, {pipeline_mode = #tpu.pipeline_mode<synchronous>, transform_indices = @transform_1, window_bounds = array<i64: 128, 128>}, {pipeline_mode = #tpu.pipeline_mode<synchronous>, transform_indices = @transform_2, window_bounds = array<i64: 1, 128>}, {pipeline_mode = #tpu.pipeline_mode<synchronous>, transform_indices = @transform_3, window_bounds = array<i64: 128, 128>}, {pipeline_mode = #tpu.pipeline_mode<synchronous>, transform_indices = @transform_4, window_bounds = array<i64: 1, 128>}, {pipeline_mode = #tpu.pipeline_mode<synchronous>, transform_indices = @transform_5, window_bounds = array<i64: 128, 128>}, {pipeline_mode = #tpu.pipeline_mode<synchronous>, transform_indices = @transform_6, window_bounds = array<i64: 1, 128>}, {transform_indices = @transform_7, window_bounds = array<i64: 112, 128>}]} {
    %c0 = arith.constant 0 : index
    %c0_0 = arith.constant 0 : index
    %0 = vector.load %arg1[%c0, %c0_0] : memref<112x128xbf16, #tpu.memory_space<vmem>>, vector<112x128xbf16>
    %c0_1 = arith.constant 0 : index
    %c0_2 = arith.constant 0 : index
    %1 = vector.load %arg2[%c0_1, %c0_2] : memref<128x128xbf16, #tpu.memory_space<vmem>>, vector<128x128xbf16>
    %cst = arith.constant dense<0.000000e+00> : vector<112x128xf32>
    %2 = tpu.matmul %0, %1, %cst {dimension_numbers = #tpu.dot_dimension_numbers<[1], [0], [0], [1], [0, 0, 1, 1], [], []>} : vector<112x128xbf16>, vector<128x128xbf16>, vector<112x128xf32> -> vector<112x128xf32>
    %c0_3 = arith.constant 0 : index
    %c0_4 = arith.constant 0 : index
    %3 = vector.load %arg3[%c0_3, %c0_4] : memref<1x128xf32, #tpu.memory_space<vmem>>, vector<1x128xf32>
    %4 = vector.broadcast %3 : vector<1x128xf32> to vector<112x128xf32>
    %5 = arith.addf %2, %4 : vector<112x128xf32>
    %cst_5 = arith.constant 0.000000e+00 : f32
    %6 = vector.broadcast %cst_5 : f32 to vector<112x128xf32>
    %7 = arith.maximumf %5, %6 : vector<112x128xf32>
    %8 = arith.truncf %7 : vector<112x128xf32> to vector<112x128xbf16>
    %c0_6 = arith.constant 0 : index
    %c0_7 = arith.constant 0 : index
    %9 = vector.load %arg4[%c0_6, %c0_7] : memref<128x128xbf16, #tpu.memory_space<vmem>>, vector<128x128xbf16>
    %cst_8 = arith.constant dense<0.000000e+00> : vector<112x128xf32>
    %10 = tpu.matmul %8, %9, %cst_8 {dimension_numbers = #tpu.dot_dimension_numbers<[1], [0], [0], [1], [0, 0, 1, 1], [], []>} : vector<112x128xbf16>, vector<128x128xbf16>, vector<112x128xf32> -> vector<112x128xf32>
    %c0_9 = arith.constant 0 : index
    %c0_10 = arith.constant 0 : index
    %11 = vector.load %arg5[%c0_9, %c0_10] : memref<1x128xf32, #tpu.memory_space<vmem>>, vector<1x128xf32>
    %12 = vector.broadcast %11 : vector<1x128xf32> to vector<112x128xf32>
    %13 = arith.addf %10, %12 : vector<112x128xf32>
    %cst_11 = arith.constant 0.000000e+00 : f32
    %14 = vector.broadcast %cst_11 : f32 to vector<112x128xf32>
    %15 = arith.maximumf %13, %14 : vector<112x128xf32>
    %16 = arith.truncf %15 : vector<112x128xf32> to vector<112x128xbf16>
    %c0_12 = arith.constant 0 : index
    %c0_13 = arith.constant 0 : index
    %17 = vector.load %arg6[%c0_12, %c0_13] : memref<128x128xbf16, #tpu.memory_space<vmem>>, vector<128x128xbf16>
    %cst_14 = arith.constant dense<0.000000e+00> : vector<112x128xf32>
    %18 = tpu.matmul %16, %17, %cst_14 {dimension_numbers = #tpu.dot_dimension_numbers<[1], [0], [0], [1], [0, 0, 1, 1], [], []>} : vector<112x128xbf16>, vector<128x128xbf16>, vector<112x128xf32> -> vector<112x128xf32>
    %c0_15 = arith.constant 0 : index
    %c0_16 = arith.constant 0 : index
    %19 = vector.load %arg7[%c0_15, %c0_16] : memref<1x128xf32, #tpu.memory_space<vmem>>, vector<1x128xf32>
    %20 = vector.broadcast %19 : vector<1x128xf32> to vector<112x128xf32>
    %21 = arith.addf %18, %20 : vector<112x128xf32>
    %22 = arith.truncf %21 : vector<112x128xf32> to vector<112x128xbf16>
    %c0_17 = arith.constant 0 : index
    %c0_18 = arith.constant 0 : index
    %23 = vector.load %arg8[%c0_17, %c0_18] : memref<112x128xbf16, #tpu.memory_space<vmem>>, vector<112x128xbf16>
    tpu.vector_store %arg8[%c0_17, %c0_18], %22 {strides = array<i32>} : memref<112x128xbf16, #tpu.memory_space<vmem>>, vector<112x128xbf16>,
    return
  }
  func.func @transform_0(%arg0: i32) -> (i32, i32) {
    %c0_i32 = arith.constant 0 : i32
    %c0_i32_0 = arith.constant 0 : i32
    return %arg0, %c0_i32 : i32, i32
  }
  func.func @transform_1(%arg0: i32) -> (i32, i32) {
    %c0_i32 = arith.constant 0 : i32
    %c0_i32_0 = arith.constant 0 : i32
    %c0_i32_1 = arith.constant 0 : i32
    return %c0_i32, %c0_i32_0 : i32, i32
  }
  func.func @transform_2(%arg0: i32) -> (i32, i32) {
    %c0_i32 = arith.constant 0 : i32
    %c0_i32_0 = arith.constant 0 : i32
    %c0_i32_1 = arith.constant 0 : i32
    return %c0_i32, %c0_i32_0 : i32, i32
  }
  func.func @transform_3(%arg0: i32) -> (i32, i32) {
    %c0_i32 = arith.constant 0 : i32
    %c0_i32_0 = arith.constant 0 : i32
    %c0_i32_1 = arith.constant 0 : i32
    return %c0_i32, %c0_i32_0 : i32, i32
  }
  func.func @transform_4(%arg0: i32) -> (i32, i32) {
    %c0_i32 = arith.constant 0 : i32
    %c0_i32_0 = arith.constant 0 : i32
    %c0_i32_1 = arith.constant 0 : i32
    return %c0_i32, %c0_i32_0 : i32, i32
  }
  func.func @transform_5(%arg0: i32) -> (i32, i32) {
    %c0_i32 = arith.constant 0 : i32
    %c0_i32_0 = arith.constant 0 : i32
    %c0_i32_1 = arith.constant 0 : i32
    return %c0_i32, %c0_i32_0 : i32, i32
  }
  func.func @transform_6(%arg0: i32) -> (i32, i32) {
    %c0_i32 = arith.constant 0 : i32
    %c0_i32_0 = arith.constant 0 : i32
    %c0_i32_1 = arith.constant 0 : i32
    return %c0_i32, %c0_i32_0 : i32, i32
  }
  func.func @transform_7(%arg0: i32) -> (i32, i32) {
    %c0_i32 = arith.constant 0 : i32
    %c0_i32_0 = arith.constant 0 : i32
    return %arg0, %c0_i32 : i32, i32
  }
}

</mosaic_0001>

<llo_original>
// kernel: _feedforward_net_impl.1
$region0: #{_feedforward_net_impl.1}
  #allocation0 [shape = 'u32[]', space=smem, size = 0x4, offset = 0x4, fixed_abs, tag = 'smem constant byte address 0x4 - core index']
  #allocation1 [shape = 'u32[144,128]{1,0:T(1,128)}', space=vmem, size = 0x12000, scoped, tag = 'internal scratch']
  %s0 = inlined_call_operand.vmem [shape: bf16[112,128], index: 0, kind: input, shape index: {}]
  %s1 = inlined_call_operand.vmem [shape: bf16[128,128], index: 1, kind: input, shape index: {}]
  %s2 = inlined_call_operand.vmem [shape: f32[1,128], index: 2, kind: input, shape index: {}]
  %s3 = inlined_call_operand.vmem [shape: bf16[128,128], index: 3, kind: input, shape index: {}]
  %s4 = inlined_call_operand.vmem [shape: f32[1,128], index: 4, kind: input, shape index: {}]
  %s5 = inlined_call_operand.vmem [shape: bf16[128,128], index: 5, kind: input, shape index: {}]
  %s6 = inlined_call_operand.vmem [shape: f32[1,128], index: 6, kind: input, shape index: {}]
  %s7 = inlined_call_operand.vmem [shape: bf16[112,128], index: 7, kind: output, shape index: {}]
  %s8 = sld [smem:[#allocation0]]
  $region38: #{_feedforward_net_impl.1} parent=0
    _
  %s10 = ssub.s32 1, %s8
  %s11 = scalar_select 0, %s10, %s8
  // Predicated region
  $region2: #{_feedforward_net_impl.1} parent=0 // pred_check
    _
  $region3: #{_feedforward_net_impl.1} parent=0 // pred_check_branch
    %13 = sbr.rel (0) target = $region5
  $region4: #{_feedforward_net_impl.1} parent=0 // pred_region
    _
  $region5: #{_feedforward_net_impl.1} parent=0 // pred_fallthru
    _
  // Predicated region
  $region6: #{_feedforward_net_impl.1} parent=0 // pred_check
    _
  $region7: #{_feedforward_net_impl.1} parent=0 // pred_check_branch
    %15 = sbr.rel (0) target = $region9
  $region8: #{_feedforward_net_impl.1} parent=0 // pred_region
    _
  $region9: #{_feedforward_net_impl.1} parent=0 // pred_fallthru
    _
  // Predicated region
  $region10: #{_feedforward_net_impl.1} parent=0 // pred_check
    _
  $region11: #{_feedforward_net_impl.1} parent=0 // pred_check_branch
    %17 = sbr.rel (0) target = $region13
  $region12: #{_feedforward_net_impl.1} parent=0 // pred_region
    _
  $region13: #{_feedforward_net_impl.1} parent=0 // pred_fallthru
    _
  // Predicated region
  $region14: #{_feedforward_net_impl.1} parent=0 // pred_check
    _
  $region15: #{_feedforward_net_impl.1} parent=0 // pred_check_branch
    %19 = sbr.rel (0) target = $region17
  $region16: #{_feedforward_net_impl.1} parent=0 // pred_region
    _
  $region17: #{_feedforward_net_impl.1} parent=0 // pred_fallthru
    _
  // Predicated region
  $region18: #{_feedforward_net_impl.1} parent=0 // pred_check
    _
  $region19: #{_feedforward_net_impl.1} parent=0 // pred_check_branch
    %21 = sbr.rel (0) target = $region21
  $region20: #{_feedforward_net_impl.1} parent=0 // pred_region
    _
  $region21: #{_feedforward_net_impl.1} parent=0 // pred_fallthru
    _
  // Predicated region
  $region22: #{_feedforward_net_impl.1} parent=0 // pred_check
    _
  $region23: #{_feedforward_net_impl.1} parent=0 // pred_check_branch
    %23 = sbr.rel (0) target = $region25
  $region24: #{_feedforward_net_impl.1} parent=0 // pred_region
    _
  $region25: #{_feedforward_net_impl.1} parent=0 // pred_fallthru
    _
  // Predicated region
  $region26: #{_feedforward_net_impl.1} parent=0 // pred_check
    _
  $region27: #{_feedforward_net_impl.1} parent=0 // pred_check_branch
    %25 = sbr.rel (0) target = $region29
  $region28: #{_feedforward_net_impl.1} parent=0 // pred_region
    _
  $region29: #{_feedforward_net_impl.1} parent=0 // pred_fallthru
    _
  %v27 = vld [vmem:[%s0] sm:$0xf]
  %v28 = vld [vmem:[%s0 + $0x4] sm:$0xf]
  %v29 = vld [vmem:[%s0 + $0x8] sm:$0xf]
  %v30 = vld [vmem:[%s0 + $0xc] sm:$0xf]
  %v31 = vld [vmem:[%s0 + $0x10] sm:$0xf]
  %v32 = vld [vmem:[%s0 + $0x14] sm:$0xf]
  %v33 = vld [vmem:[%s0 + $0x18] sm:$0xf]
  %v34 = vld [vmem:[%s0 + $0x1c] sm:$0xf]
  %v35 = vld [vmem:[%s0 + $0x20] sm:$0xf]
  %v36 = vld [vmem:[%s0 + $0x24] sm:$0xf]
  %v37 = vld [vmem:[%s0 + $0x28] sm:$0xf]
  %v38 = vld [vmem:[%s0 + $0x2c] sm:$0xf]
  %v39 = vld [vmem:[%s0 + $0x30] sm:$0xf]
  %v40 = vld [vmem:[%s0 + $0x34] sm:$0xf]
  %v41 = vld [vmem:[%s1] sm:$0xf]
  %v42 = vld [vmem:[%s1 + $0x4] sm:$0xf]
  %v43 = vld [vmem:[%s1 + $0x8] sm:$0xf]
  %v44 = vld [vmem:[%s1 + $0xc] sm:$0xf]
  %v45 = vld [vmem:[%s1 + $0x10] sm:$0xf]
  %v46 = vld [vmem:[%s1 + $0x14] sm:$0xf]
  %v47 = vld [vmem:[%s1 + $0x18] sm:$0xf]
  %v48 = vld [vmem:[%s1 + $0x1c] sm:$0xf]
  %v49 = vld [vmem:[%s1 + $0x20] sm:$0xf]
  %v50 = vld [vmem:[%s1 + $0x24] sm:$0xf]
  %v51 = vld [vmem:[%s1 + $0x28] sm:$0xf]
  %v52 = vld [vmem:[%s1 + $0x2c] sm:$0xf]
  %v53 = vld [vmem:[%s1 + $0x30] sm:$0xf]
  %v54 = vld [vmem:[%s1 + $0x34] sm:$0xf]
  %v55 = vld [vmem:[%s1 + $0x38] sm:$0xf]
  %v56 = vld [vmem:[%s1 + $0x3c] sm:$0xf]
  %v57 = vld [vmem:[%s2] sm:$0x1]
  %v59 = vlaneseq
  %v60 = vshrl.u32 %v59, 7
  %v61 = vsub.s32 0, %v60
  %v62 = vrot.slane %v57, %v61
  %v78 = vunpack.c.l.b16 %v27
  %v79 = vunpack.c.l.b16 %v28
  %v80 = vunpack.c.l.b16 %v29
  %v81 = vunpack.c.l.b16 %v30
  %v82 = vunpack.c.l.b16 %v31
  %v83 = vunpack.c.l.b16 %v32
  %v84 = vunpack.c.l.b16 %v33
  %v85 = vunpack.c.l.b16 %v34
  %v86 = vunpack.c.l.b16 %v35
  %v87 = vunpack.c.l.b16 %v36
  %v88 = vunpack.c.l.b16 %v37
  %v89 = vunpack.c.l.b16 %v38
  %v90 = vunpack.c.l.b16 %v39
  %v91 = vunpack.c.l.b16 %v40
  %v92 = vpack.c.b16 %v79, %v78
  %v93 = vpack.c.b16 %v81, %v80
  %v94 = vpack.c.b16 %v83, %v82
  %v95 = vpack.c.b16 %v85, %v84
  %v96 = vpack.c.b16 %v87, %v86
  %v97 = vpack.c.b16 %v89, %v88
  %v98 = vpack.c.b16 %v91, %v90
  %v122 = vunpack.c.l.b16 %v41
  %v123 = vunpack.c.l.b16 %v42
  %v124 = vunpack.c.l.b16 %v43
  %v125 = vunpack.c.l.b16 %v44
  %v126 = vunpack.c.l.b16 %v45
  %v127 = vunpack.c.l.b16 %v46
  %v128 = vunpack.c.l.b16 %v47
  %v129 = vunpack.c.l.b16 %v48
  %v130 = vunpack.c.l.b16 %v49
  %v131 = vunpack.c.l.b16 %v50
  %v132 = vunpack.c.l.b16 %v51
  %v133 = vunpack.c.l.b16 %v52
  %v134 = vunpack.c.l.b16 %v53
  %v135 = vunpack.c.l.b16 %v54
  %v136 = vunpack.c.l.b16 %v55
  %v137 = vunpack.c.l.b16 %v56
  %v138 = vpack.c.b16 %v123, %v122
  %v139 = vpack.c.b16 %v125, %v124
  %v140 = vpack.c.b16 %v127, %v126
  %v141 = vpack.c.b16 %v129, %v128
  %v142 = vpack.c.b16 %v131, %v130
  %v143 = vpack.c.b16 %v133, %v132
  %v144 = vpack.c.b16 %v135, %v134
  %v145 = vpack.c.b16 %v137, %v136
  %154 = vmatprep.subr.bf16.mxu0 0
  %155 = vmatpush1.bf16.msra.mxu0 %v138
  %156 = vmatprep.subr.bf16.mxu0 0
  %157 = vmatpush1.bf16.msra.mxu0 %v139
  %158 = vmatprep.subr.bf16.mxu0 0
  %159 = vmatpush1.bf16.msra.mxu0 %v140
  %160 = vmatprep.subr.bf16.mxu0 0
  %161 = vmatpush1.bf16.msra.mxu0 %v141
  %162 = vmatprep.subr.bf16.mxu0 0
  %163 = vmatpush1.bf16.msra.mxu0 %v142
  %164 = vmatprep.subr.bf16.mxu0 0
  %165 = vmatpush1.bf16.msra.mxu0 %v143
  %166 = vmatprep.subr.bf16.mxu0 0
  %167 = vmatpush1.bf16.msra.mxu0 %v144
  %168 = vmatprep.subr.bf16.mxu0 0
  %169 = vmatpush1.bf16.msra.mxu0 %v145
  %170 = vmatprep.subr.bf16.mxu0 0
  %171 = vmatpush1.bf16.msra.mxu0 0
  %172 = vmatprep.subr.bf16.mxu0 0
  %173 = vmatpush1.bf16.msra.mxu0 0
  %174 = vmatprep.subr.bf16.mxu0 0
  %175 = vmatpush1.bf16.msra.mxu0 0
  %176 = vmatprep.subr.bf16.mxu0 0
  %177 = vmatpush1.bf16.msra.mxu0 0
  %178 = vmatprep.subr.bf16.mxu0 0
  %179 = vmatpush1.bf16.msra.mxu0 0
  %180 = vmatprep.subr.bf16.mxu0 0
  %181 = vmatpush1.bf16.msra.mxu0 0
  %182 = vmatprep.subr.bf16.mxu0 0
  %183 = vmatpush1.bf16.msra.mxu0 0
  %184 = vmatprep.subr.bf16.mxu0 0
  %185 = vmatpush1.bf16.msra.mxu0 0
  %186 = vmatprep.mubr.bf16.mxu0 0
  %187 = vmatmul.mubr.bf16.gmra.mrb[0].mxu0 %v92
  %v188 = vpop.f32.mrb[0].mxu0
  %v189 = vadd.f32 %v62, %v188
  %v190 = vpop.f32.mrb[0].mxu0
  %v191 = vpop.f32.mrb[0].mxu0
  %v192 = vadd.f32 %v62, %v191
  %v193 = vpop.f32.mrb[0].mxu0
  %194 = vmatprep.mubr.bf16.mxu0 0
  %195 = vmatmul.mubr.bf16.gmra.mrb[0].mxu0 %v93
  %v196 = vpop.f32.mrb[0].mxu0
  %v197 = vadd.f32 %v62, %v196
  %v198 = vpop.f32.mrb[0].mxu0
  %v199 = vpop.f32.mrb[0].mxu0
  %v200 = vadd.f32 %v62, %v199
  %v201 = vpop.f32.mrb[0].mxu0
  %202 = vmatprep.mubr.bf16.mxu0 0
  %203 = vmatmul.mubr.bf16.gmra.mrb[0].mxu0 %v94
  %v204 = vpop.f32.mrb[0].mxu0
  %v205 = vadd.f32 %v62, %v204
  %v206 = vpop.f32.mrb[0].mxu0
  %v207 = vpop.f32.mrb[0].mxu0
  %v208 = vadd.f32 %v62, %v207
  %v209 = vpop.f32.mrb[0].mxu0
  %210 = vmatprep.mubr.bf16.mxu0 0
  %211 = vmatmul.mubr.bf16.gmra.mrb[0].mxu0 %v95
  %v212 = vpop.f32.mrb[0].mxu0
  %v213 = vadd.f32 %v62, %v212
  %v214 = vpop.f32.mrb[0].mxu0
  %v215 = vpop.f32.mrb[0].mxu0
  %v216 = vadd.f32 %v62, %v215
  %v217 = vpop.f32.mrb[0].mxu0
  %218 = vmatprep.mubr.bf16.mxu0 0
  %219 = vmatmul.mubr.bf16.gmra.mrb[0].mxu0 %v96
  %v220 = vpop.f32.mrb[0].mxu0
  %v221 = vadd.f32 %v62, %v220
  %v222 = vpop.f32.mrb[0].mxu0
  %v223 = vpop.f32.mrb[0].mxu0
  %v224 = vadd.f32 %v62, %v223
  %v225 = vpop.f32.mrb[0].mxu0
  %226 = vmatprep.mubr.bf16.mxu0 0
  %227 = vmatmul.mubr.bf16.gmra.mrb[0].mxu0 %v97
  %v228 = vpop.f32.mrb[0].mxu0
  %v229 = vadd.f32 %v62, %v228
  %v230 = vpop.f32.mrb[0].mxu0
  %v231 = vpop.f32.mrb[0].mxu0
  %v232 = vadd.f32 %v62, %v231
  %v233 = vpop.f32.mrb[0].mxu0
  %234 = vmatprep.mubr.bf16.mxu0 0
  %235 = vmatmul.mubr.bf16.gmra.mrb[0].mxu0 %v98
  %v236 = vpop.f32.mrb[0].mxu0
  %v237 = vadd.f32 %v62, %v236
  %v238 = vpop.f32.mrb[0].mxu0
  %v239 = vpop.f32.mrb[0].mxu0
  %v240 = vadd.f32 %v62, %v239
  %v241 = vpop.f32.mrb[0].mxu0
  %242 = vdwg.mxu0
  %v243 = vmax.f32 %v189, 0.0
  %v244 = vmax.f32 %v192, 0.0
  %v245 = vmax.f32 %v197, 0.0
  %v246 = vmax.f32 %v200, 0.0
  %v247 = vmax.f32 %v205, 0.0
  %v248 = vmax.f32 %v208, 0.0
  %v249 = vmax.f32 %v213, 0.0
  %v250 = vmax.f32 %v216, 0.0
  %v251 = vmax.f32 %v221, 0.0
  %v252 = vmax.f32 %v224, 0.0
  %v253 = vmax.f32 %v229, 0.0
  %v254 = vmax.f32 %v232, 0.0
  %v255 = vmax.f32 %v237, 0.0
  %v256 = vmax.f32 %v240, 0.0
  %v257 = vpack.c.bf16 %v244, %v243
  %v258 = vpack.c.bf16 %v246, %v245
  %v259 = vpack.c.bf16 %v248, %v247
  %v260 = vpack.c.bf16 %v250, %v249
  %v261 = vpack.c.bf16 %v252, %v251
  %v262 = vpack.c.bf16 %v254, %v253
  %v263 = vpack.c.bf16 %v256, %v255
  %v264 = vld [vmem:[%s3] sm:$0xf]
  %v265 = vld [vmem:[%s3 + $0x4] sm:$0xf]
  %v266 = vld [vmem:[%s3 + $0x8] sm:$0xf]
  %v267 = vld [vmem:[%s3 + $0xc] sm:$0xf]
  %v268 = vld [vmem:[%s3 + $0x10] sm:$0xf]
  %v269 = vld [vmem:[%s3 + $0x14] sm:$0xf]
  %v270 = vld [vmem:[%s3 + $0x18] sm:$0xf]
  %v271 = vld [vmem:[%s3 + $0x1c] sm:$0xf]
  %v272 = vld [vmem:[%s3 + $0x20] sm:$0xf]
  %v273 = vld [vmem:[%s3 + $0x24] sm:$0xf]
  %v274 = vld [vmem:[%s3 + $0x28] sm:$0xf]
  %v275 = vld [vmem:[%s3 + $0x2c] sm:$0xf]
  %v276 = vld [vmem:[%s3 + $0x30] sm:$0xf]
  %v277 = vld [vmem:[%s3 + $0x34] sm:$0xf]
  %v278 = vld [vmem:[%s3 + $0x38] sm:$0xf]
  %v279 = vld [vmem:[%s3 + $0x3c] sm:$0xf]
  %v280 = vld [vmem:[%s4] sm:$0x1]
  %v282 = vlaneseq
  %v283 = vshrl.u32 %v282, 7
  %v284 = vsub.s32 0, %v283
  %v285 = vrot.slane %v280, %v284
  %v303 = vunpack.c.l.b16 %v264
  %v304 = vunpack.c.l.b16 %v265
  %v305 = vunpack.c.l.b16 %v266
  %v306 = vunpack.c.l.b16 %v267
  %v307 = vunpack.c.l.b16 %v268
  %v308 = vunpack.c.l.b16 %v269
  %v309 = vunpack.c.l.b16 %v270
  %v310 = vunpack.c.l.b16 %v271
  %v311 = vunpack.c.l.b16 %v272
  %v312 = vunpack.c.l.b16 %v273
  %v313 = vunpack.c.l.b16 %v274
  %v314 = vunpack.c.l.b16 %v275
  %v315 = vunpack.c.l.b16 %v276
  %v316 = vunpack.c.l.b16 %v277
  %v317 = vunpack.c.l.b16 %v278
  %v318 = vunpack.c.l.b16 %v279
  %v319 = vpack.c.b16 %v304, %v303
  %v320 = vpack.c.b16 %v306, %v305
  %v321 = vpack.c.b16 %v308, %v307
  %v322 = vpack.c.b16 %v310, %v309
  %v323 = vpack.c.b16 %v312, %v311
  %v324 = vpack.c.b16 %v314, %v313
  %v325 = vpack.c.b16 %v316, %v315
  %v326 = vpack.c.b16 %v318, %v317
  %335 = vmatprep.subr.bf16.mxu0 0
  %336 = vmatpush1.bf16.msra.mxu0 %v319
  %337 = vmatprep.subr.bf16.mxu0 0
  %338 = vmatpush1.bf16.msra.mxu0 %v320
  %339 = vmatprep.subr.bf16.mxu0 0
  %340 = vmatpush1.bf16.msra.mxu0 %v321
  %341 = vmatprep.subr.bf16.mxu0 0
  %342 = vmatpush1.bf16.msra.mxu0 %v322
  %343 = vmatprep.subr.bf16.mxu0 0
  %344 = vmatpush1.bf16.msra.mxu0 %v323
  %345 = vmatprep.subr.bf16.mxu0 0
  %346 = vmatpush1.bf16.msra.mxu0 %v324
  %347 = vmatprep.subr.bf16.mxu0 0
  %348 = vmatpush1.bf16.msra.mxu0 %v325
  %349 = vmatprep.subr.bf16.mxu0 0
  %350 = vmatpush1.bf16.msra.mxu0 %v326
  %351 = vmatprep.subr.bf16.mxu0 0
  %352 = vmatpush1.bf16.msra.mxu0 0
  %353 = vmatprep.subr.bf16.mxu0 0
  %354 = vmatpush1.bf16.msra.mxu0 0
  %355 = vmatprep.subr.bf16.mxu0 0
  %356 = vmatpush1.bf16.msra.mxu0 0
  %357 = vmatprep.subr.bf16.mxu0 0
  %358 = vmatpush1.bf16.msra.mxu0 0
  %359 = vmatprep.subr.bf16.mxu0 0
  %360 = vmatpush1.bf16.msra.mxu0 0
  %361 = vmatprep.subr.bf16.mxu0 0
  %362 = vmatpush1.bf16.msra.mxu0 0
  %363 = vmatprep.subr.bf16.mxu0 0
  %364 = vmatpush1.bf16.msra.mxu0 0
  %365 = vmatprep.subr.bf16.mxu0 0
  %366 = vmatpush1.bf16.msra.mxu0 0
  %367 = vmatprep.mubr.bf16.mxu0 0
  %368 = vmatmul.mubr.bf16.gmra.mrb[0].mxu0 %v257
  %v369 = vpop.f32.mrb[0].mxu0
  %v370 = vadd.f32 %v285, %v369
  %v371 = vpop.f32.mrb[0].mxu0
  %v372 = vpop.f32.mrb[0].mxu0
  %v373 = vadd.f32 %v285, %v372
  %v374 = vpop.f32.mrb[0].mxu0
  %375 = vmatprep.mubr.bf16.mxu0 0
  %376 = vmatmul.mubr.bf16.gmra.mrb[0].mxu0 %v258
  %v377 = vpop.f32.mrb[0].mxu0
  %v378 = vadd.f32 %v285, %v377
  %v379 = vpop.f32.mrb[0].mxu0
  %v380 = vpop.f32.mrb[0].mxu0
  %v381 = vadd.f32 %v285, %v380
  %v382 = vpop.f32.mrb[0].mxu0
  %383 = vmatprep.mubr.bf16.mxu0 0
  %384 = vmatmul.mubr.bf16.gmra.mrb[0].mxu0 %v259
  %v385 = vpop.f32.mrb[0].mxu0
  %v386 = vadd.f32 %v285, %v385
  %v387 = vpop.f32.mrb[0].mxu0
  %v388 = vpop.f32.mrb[0].mxu0
  %v389 = vadd.f32 %v285, %v388
  %v390 = vpop.f32.mrb[0].mxu0
  %391 = vmatprep.mubr.bf16.mxu0 0
  %392 = vmatmul.mubr.bf16.gmra.mrb[0].mxu0 %v260
  %v393 = vpop.f32.mrb[0].mxu0
  %v394 = vadd.f32 %v285, %v393
  %v395 = vpop.f32.mrb[0].mxu0
  %v396 = vpop.f32.mrb[0].mxu0
  %v397 = vadd.f32 %v285, %v396
  %v398 = vpop.f32.mrb[0].mxu0
  %399 = vmatprep.mubr.bf16.mxu0 0
  %400 = vmatmul.mubr.bf16.gmra.mrb[0].mxu0 %v261
  %v401 = vpop.f32.mrb[0].mxu0
  %v402 = vadd.f32 %v285, %v401
  %v403 = vpop.f32.mrb[0].mxu0
  %v404 = vpop.f32.mrb[0].mxu0
  %v405 = vadd.f32 %v285, %v404
  %v406 = vpop.f32.mrb[0].mxu0
  %407 = vmatprep.mubr.bf16.mxu0 0
  %408 = vmatmul.mubr.bf16.gmra.mrb[0].mxu0 %v262
  %v409 = vpop.f32.mrb[0].mxu0
  %v410 = vadd.f32 %v285, %v409
  %v411 = vpop.f32.mrb[0].mxu0
  %v412 = vpop.f32.mrb[0].mxu0
  %v413 = vadd.f32 %v285, %v412
  %v414 = vpop.f32.mrb[0].mxu0
  %415 = vmatprep.mubr.bf16.mxu0 0
  %416 = vmatmul.mubr.bf16.gmra.mrb[0].mxu0 %v263
  %v417 = vpop.f32.mrb[0].mxu0
  %v418 = vadd.f32 %v285, %v417
  %v419 = vpop.f32.mrb[0].mxu0
  %v420 = vpop.f32.mrb[0].mxu0
  %v421 = vadd.f32 %v285, %v420
  %v422 = vpop.f32.mrb[0].mxu0
  %423 = vdwg.mxu0
  %v424 = vmax.f32 %v370, 0.0
  %v425 = vmax.f32 %v373, 0.0
  %v426 = vmax.f32 %v378, 0.0
  %v427 = vmax.f32 %v381, 0.0
  %v428 = vmax.f32 %v386, 0.0
  %v429 = vmax.f32 %v389, 0.0
  %v430 = vmax.f32 %v394, 0.0
  %v431 = vmax.f32 %v397, 0.0
  %v432 = vmax.f32 %v402, 0.0
  %v433 = vmax.f32 %v405, 0.0
  %v434 = vmax.f32 %v410, 0.0
  %v435 = vmax.f32 %v413, 0.0
  %v436 = vmax.f32 %v418, 0.0
  %v437 = vmax.f32 %v421, 0.0
  %v438 = vpack.c.bf16 %v425, %v424
  %v439 = vpack.c.bf16 %v427, %v426
  %v440 = vpack.c.bf16 %v429, %v428
  %v441 = vpack.c.bf16 %v431, %v430
  %v442 = vpack.c.bf16 %v433, %v432
  %v443 = vpack.c.bf16 %v435, %v434
  %v444 = vpack.c.bf16 %v437, %v436
  %v445 = vld [vmem:[%s5] sm:$0xf]
  %v446 = vld [vmem:[%s5 + $0x4] sm:$0xf]
  %v447 = vld [vmem:[%s5 + $0x8] sm:$0xf]
  %v448 = vld [vmem:[%s5 + $0xc] sm:$0xf]
  %v449 = vld [vmem:[%s5 + $0x10] sm:$0xf]
  %v450 = vld [vmem:[%s5 + $0x14] sm:$0xf]
  %v451 = vld [vmem:[%s5 + $0x18] sm:$0xf]
  %v452 = vld [vmem:[%s5 + $0x1c] sm:$0xf]
  %v453 = vld [vmem:[%s5 + $0x20] sm:$0xf]
  %v454 = vld [vmem:[%s5 + $0x24] sm:$0xf]
  %v455 = vld [vmem:[%s5 + $0x28] sm:$0xf]
  %v456 = vld [vmem:[%s5 + $0x2c] sm:$0xf]
  %v457 = vld [vmem:[%s5 + $0x30] sm:$0xf]
  %v458 = vld [vmem:[%s5 + $0x34] sm:$0xf]
  %v459 = vld [vmem:[%s5 + $0x38] sm:$0xf]
  %v460 = vld [vmem:[%s5 + $0x3c] sm:$0xf]
  %v461 = vld [vmem:[%s6] sm:$0x1]
  %v463 = vlaneseq
  %v464 = vshrl.u32 %v463, 7
  %v465 = vsub.s32 0, %v464
  %v466 = vrot.slane %v461, %v465
  %v484 = vunpack.c.l.b16 %v445
  %v485 = vunpack.c.l.b16 %v446
  %v486 = vunpack.c.l.b16 %v447
  %v487 = vunpack.c.l.b16 %v448
  %v488 = vunpack.c.l.b16 %v449
  %v489 = vunpack.c.l.b16 %v450
  %v490 = vunpack.c.l.b16 %v451
  %v491 = vunpack.c.l.b16 %v452
  %v492 = vunpack.c.l.b16 %v453
  %v493 = vunpack.c.l.b16 %v454
  %v494 = vunpack.c.l.b16 %v455
  %v495 = vunpack.c.l.b16 %v456
  %v496 = vunpack.c.l.b16 %v457
  %v497 = vunpack.c.l.b16 %v458
  %v498 = vunpack.c.l.b16 %v459
  %v499 = vunpack.c.l.b16 %v460
  %v500 = vpack.c.b16 %v485, %v484
  %v501 = vpack.c.b16 %v487, %v486
  %v502 = vpack.c.b16 %v489, %v488
  %v503 = vpack.c.b16 %v491, %v490
  %v504 = vpack.c.b16 %v493, %v492
  %v505 = vpack.c.b16 %v495, %v494
  %v506 = vpack.c.b16 %v497, %v496
  %v507 = vpack.c.b16 %v499, %v498
  %516 = vmatprep.subr.bf16.mxu0 0
  %517 = vmatpush1.bf16.msra.mxu0 %v500
  %518 = vmatprep.subr.bf16.mxu0 0
  %519 = vmatpush1.bf16.msra.mxu0 %v501
  %520 = vmatprep.subr.bf16.mxu0 0
  %521 = vmatpush1.bf16.msra.mxu0 %v502
  %522 = vmatprep.subr.bf16.mxu0 0
  %523 = vmatpush1.bf16.msra.mxu0 %v503
  %524 = vmatprep.subr.bf16.mxu0 0
  %525 = vmatpush1.bf16.msra.mxu0 %v504
  %526 = vmatprep.subr.bf16.mxu0 0
  %527 = vmatpush1.bf16.msra.mxu0 %v505
  %528 = vmatprep.subr.bf16.mxu0 0
  %529 = vmatpush1.bf16.msra.mxu0 %v506
  %530 = vmatprep.subr.bf16.mxu0 0
  %531 = vmatpush1.bf16.msra.mxu0 %v507
  %532 = vmatprep.subr.bf16.mxu0 0
  %533 = vmatpush1.bf16.msra.mxu0 0
  %534 = vmatprep.subr.bf16.mxu0 0
  %535 = vmatpush1.bf16.msra.mxu0 0
  %536 = vmatprep.subr.bf16.mxu0 0
  %537 = vmatpush1.bf16.msra.mxu0 0
  %538 = vmatprep.subr.bf16.mxu0 0
  %539 = vmatpush1.bf16.msra.mxu0 0
  %540 = vmatprep.subr.bf16.mxu0 0
  %541 = vmatpush1.bf16.msra.mxu0 0
  %542 = vmatprep.subr.bf16.mxu0 0
  %543 = vmatpush1.bf16.msra.mxu0 0
  %544 = vmatprep.subr.bf16.mxu0 0
  %545 = vmatpush1.bf16.msra.mxu0 0
  %546 = vmatprep.subr.bf16.mxu0 0
  %547 = vmatpush1.bf16.msra.mxu0 0
  %548 = vmatprep.mubr.bf16.mxu0 0
  %549 = vmatmul.mubr.bf16.gmra.mrb[0].mxu0 %v438
  %v550 = vpop.f32.mrb[0].mxu0
  %v551 = vadd.f32 %v466, %v550
  %v552 = vpop.f32.mrb[0].mxu0
  %v553 = vpop.f32.mrb[0].mxu0
  %v554 = vadd.f32 %v466, %v553
  %v555 = vpop.f32.mrb[0].mxu0
  %556 = vmatprep.mubr.bf16.mxu0 0
  %557 = vmatmul.mubr.bf16.gmra.mrb[0].mxu0 %v439
  %v558 = vpop.f32.mrb[0].mxu0
  %v559 = vadd.f32 %v466, %v558
  %v560 = vpop.f32.mrb[0].mxu0
  %v561 = vpop.f32.mrb[0].mxu0
  %v562 = vadd.f32 %v466, %v561
  %v563 = vpop.f32.mrb[0].mxu0
  %564 = vmatprep.mubr.bf16.mxu0 0
  %565 = vmatmul.mubr.bf16.gmra.mrb[0].mxu0 %v440
  %v566 = vpop.f32.mrb[0].mxu0
  %v567 = vadd.f32 %v466, %v566
  %v568 = vpop.f32.mrb[0].mxu0
  %v569 = vpop.f32.mrb[0].mxu0
  %v570 = vadd.f32 %v466, %v569
  %v571 = vpop.f32.mrb[0].mxu0
  %572 = vmatprep.mubr.bf16.mxu0 0
  %573 = vmatmul.mubr.bf16.gmra.mrb[0].mxu0 %v441
  %v574 = vpop.f32.mrb[0].mxu0
  %v575 = vadd.f32 %v466, %v574
  %v576 = vpop.f32.mrb[0].mxu0
  %v577 = vpop.f32.mrb[0].mxu0
  %v578 = vadd.f32 %v466, %v577
  %v579 = vpop.f32.mrb[0].mxu0
  %580 = vmatprep.mubr.bf16.mxu0 0
  %581 = vmatmul.mubr.bf16.gmra.mrb[0].mxu0 %v442
  %v582 = vpop.f32.mrb[0].mxu0
  %v583 = vadd.f32 %v466, %v582
  %v584 = vpop.f32.mrb[0].mxu0
  %v585 = vpop.f32.mrb[0].mxu0
  %v586 = vadd.f32 %v466, %v585
  %v587 = vpop.f32.mrb[0].mxu0
  %588 = vmatprep.mubr.bf16.mxu0 0
  %589 = vmatmul.mubr.bf16.gmra.mrb[0].mxu0 %v443
  %v590 = vpop.f32.mrb[0].mxu0
  %v591 = vadd.f32 %v466, %v590
  %v592 = vpop.f32.mrb[0].mxu0
  %v593 = vpop.f32.mrb[0].mxu0
  %v594 = vadd.f32 %v466, %v593
  %v595 = vpop.f32.mrb[0].mxu0
  %596 = vmatprep.mubr.bf16.mxu0 0
  %597 = vmatmul.mubr.bf16.gmra.mrb[0].mxu0 %v444
  %v598 = vpop.f32.mrb[0].mxu0
  %v599 = vadd.f32 %v466, %v598
  %v600 = vpop.f32.mrb[0].mxu0
  %v601 = vpop.f32.mrb[0].mxu0
  %v602 = vadd.f32 %v466, %v601
  %v603 = vpop.f32.mrb[0].mxu0
  %604 = vdwg.mxu0
  %v605 = vpack.c.bf16 %v554, %v551
  %v606 = vpack.c.bf16 %v562, %v559
  %v607 = vpack.c.bf16 %v570, %v567
  %v608 = vpack.c.bf16 %v578, %v575
  %v609 = vpack.c.bf16 %v586, %v583
  %v610 = vpack.c.bf16 %v594, %v591
  %v611 = vpack.c.bf16 %v602, %v599
  %v619 = vunpack.c.l.b16 %v605
  %v620 = vunpack.c.h.b16 %v605
  %v621 = vunpack.c.l.b16 %v606
  %v622 = vunpack.c.h.b16 %v606
  %v623 = vunpack.c.l.b16 %v607
  %v624 = vunpack.c.h.b16 %v607
  %v625 = vunpack.c.l.b16 %v608
  %v626 = vunpack.c.h.b16 %v608
  %v627 = vunpack.c.l.b16 %v609
  %v628 = vunpack.c.h.b16 %v609
  %v629 = vunpack.c.l.b16 %v610
  %v630 = vunpack.c.h.b16 %v610
  %v631 = vunpack.c.l.b16 %v611
  %v632 = vunpack.c.h.b16 %v611
  %v633 = vpack.c.b16 %v619, %v619
  %v634 = vpack.c.b16 %v620, %v620
  %v635 = vpack.c.b16 %v621, %v621
  %v636 = vpack.c.b16 %v622, %v622
  %v637 = vpack.c.b16 %v623, %v623
  %v638 = vpack.c.b16 %v624, %v624
  %v639 = vpack.c.b16 %v625, %v625
  %v640 = vpack.c.b16 %v626, %v626
  %v641 = vpack.c.b16 %v627, %v627
  %v642 = vpack.c.b16 %v628, %v628
  %v643 = vpack.c.b16 %v629, %v629
  %v644 = vpack.c.b16 %v630, %v630
  %v645 = vpack.c.b16 %v631, %v631
  %v646 = vpack.c.b16 %v632, %v632
  %661 = vst [vmem:[%s7] sm:$0xf] %v633
  %662 = vst [vmem:[%s7 + $0x4] sm:$0xf] %v634
  %663 = vst [vmem:[%s7 + $0x8] sm:$0xf] %v635
  %664 = vst [vmem:[%s7 + $0xc] sm:$0xf] %v636
  %665 = vst [vmem:[%s7 + $0x10] sm:$0xf] %v637
  %666 = vst [vmem:[%s7 + $0x14] sm:$0xf] %v638
  %667 = vst [vmem:[%s7 + $0x18] sm:$0xf] %v639
  %668 = vst [vmem:[%s7 + $0x1c] sm:$0xf] %v640
  %669 = vst [vmem:[%s7 + $0x20] sm:$0xf] %v641
  %670 = vst [vmem:[%s7 + $0x24] sm:$0xf] %v642
  %671 = vst [vmem:[%s7 + $0x28] sm:$0xf] %v643
  %672 = vst [vmem:[%s7 + $0x2c] sm:$0xf] %v644
  %673 = vst [vmem:[%s7 + $0x30] sm:$0xf] %v645
  %674 = vst [vmem:[%s7 + $0x34] sm:$0xf] %v646
  // Predicated region
  $region30: #{_feedforward_net_impl.1} parent=0 // pred_check
    _
  $region31: #{_feedforward_net_impl.1} parent=0 // pred_check_branch
    %676 = sbr.rel (0) target = $region33
  $region32: #{_feedforward_net_impl.1} parent=0 // pred_region
    _
  $region33: #{_feedforward_net_impl.1} parent=0 // pred_fallthru
    _
  // Predicated region
  $region34: #{_feedforward_net_impl.1} parent=0 // pred_check
    _
  $region35: #{_feedforward_net_impl.1} parent=0 // pred_check_branch
    %678 = sbr.rel (0) target = $region37
  $region36: #{_feedforward_net_impl.1} parent=0 // pred_region
    _
  $region37: #{_feedforward_net_impl.1} parent=0 // pred_fallthru
    _

</llo_original>
